<compile_context>
chip_gen: v6e
topology: v6e:2x2x1
jax: 0.10.0
libtpu: 0.0.40
codegen_flags: <defaults>
</compile_context>

<pallas_src>
import functools

import jax
import jax.numpy as jnp
from jax.experimental import pallas as pl
from jax.experimental.pallas import tpu as pltpu


def _embed_kernel(patches_ref, w_ref, pos_ref, out_ref):
    """Single-shot M tile: (tm, K) @ (K, E_pad) + pos.  W fully resident."""
    out_ref[...] = (
        jnp.dot(patches_ref[...], w_ref[...], preferred_element_type=jnp.float32)
        + pos_ref[...]
    ).astype(out_ref.dtype)


def _embed_kernel_ktiled(patches_ref, w_ref, pos_ref, out_ref, acc_ref):
    """K-tiled variant: grid=(M_tiles, K_tiles), reduction axis (K) last."""
    k = pl.program_id(1)

    @pl.when(k == 0)
    def _():
        acc_ref[...] = jnp.zeros_like(acc_ref)

    acc_ref[...] += jnp.dot(
        patches_ref[...], w_ref[...], preferred_element_type=jnp.float32
    )

    @pl.when(k == pl.num_programs(1) - 1)
    def _():
        out_ref[...] = (acc_ref[...] + pos_ref[...]).astype(out_ref.dtype)


def embeddings_forward(x, conv_w, conv_b, pos_emb, patch_size, *,
                       tm=None, tk=None, matmul_dtype=None):
    """x: (B, C, D, H, W).  conv_w: (E, C, p, p, p).  conv_b: (E,).
    pos_emb: (1, n_patches, E).  Returns (B, n_patches, E)."""
    B, C, D, H, W = x.shape
    p = patch_size
    E = conv_w.shape[0]
    Dp, Hp, Wp = D // p, H // p, W // p
    n_patches = Dp * Hp * Wp
    K = C * p * p * p
    M = B * n_patches

    # ---- glue: patch extraction (pure reshape/transpose, no FLOPs) ----
    # (B, C, Dp, p, Hp, p, Wp, p) -> (B, Dp, Hp, Wp, C, p, p, p) -> (M, K)
    xp = x.reshape(B, C, Dp, p, Hp, p, Wp, p)
    xp = jnp.transpose(xp, (0, 2, 4, 6, 1, 3, 5, 7))
    patches = xp.reshape(M, K)

    # Conv weight (E, C, p, p, p) -> (K, E) matching the (c,i,j,k) flattening;
    # fold the conv bias into the position embedding.
    w = conv_w.reshape(E, K).T
    pos_bias = pos_emb.reshape(n_patches, E) + conv_b.reshape(1, E)

    # Lane-dense output: pad E to a multiple of 128 (zero weight/pos columns),
    # slice back in the wrapper.  No-op when E is already a multiple of 128.
    E_pad = ((E + 127) // 128) * 128
    if E_pad != E:
        w = jnp.pad(w, ((0, 0), (0, E_pad - E)))
        pos_bias = jnp.pad(pos_bias, ((0, 0), (0, E_pad - E)))

    if matmul_dtype is not None:  # optional bf16 MXU path (v6e/v7x)
        patches = patches.astype(matmul_dtype)
        w = w.astype(matmul_dtype)

    # ---- M-tile selection ----
    if tm is None:
        tm = 0
        for cand in (512, 256, 128, 64, 32, 16, 8):
            if n_patches % cand == 0:
                tm = cand
                break
        if tm == 0:
            # No sublane-aligned divisor of n_patches: fall back to a single
            # full-M tile (block == full array dim, so (8,128) rule is
            # satisfied); replicate pos across the batch so shapes line up.
            tm = M
            pos_bias = jnp.broadcast_to(
                pos_bias[None], (B, n_patches, E_pad)).reshape(M, E_pad)
    assert M % tm == 0, (M, tm)
    m_tiles = M // tm
    pos_rows = pos_bias.shape[0]
    assert pos_rows % tm == 0, (pos_rows, tm)
    pos_tiles = pos_rows // tm

    # ---- K-tile selection: keep W fully VMEM-resident when it is small ----
    w_bytes = jnp.dtype(w.dtype).itemsize
    if tk is None:
        budget = 8 * 1024 * 1024
        if 2 * K * E_pad * w_bytes <= budget or K <= 256:
            tk = K
        else:
            tk = 128
            cand = 128
            while cand < K:
                if K % cand == 0 and 2 * cand * E_pad * w_bytes <= budget:
                    tk = cand
                cand *= 2
    assert K % tk == 0, (K, tk)
    k_tiles = K // tk

    in_bytes = jnp.dtype(patches.dtype).itemsize
    out_bytes = jnp.dtype(x.dtype).itemsize
    vmem_est = (2 * tm * tk * in_bytes          # patches double buffer
                + 2 * tk * E_pad * w_bytes      # weight double buffer
                + 2 * tm * E_pad * out_bytes    # output double buffer
                + 2 * tm * E_pad * 4            # pos (f32) double buffer
                + tm * E_pad * 4)               # f32 accumulator
    vmem_limit = None
    if vmem_est > 12 * 1024 * 1024:
        vmem_limit = min(int(vmem_est * 3 // 2), 64 * 1024 * 1024)

    if k_tiles == 1:
        pos_map = ((lambda i: (0, 0)) if pos_tiles == 1
                   else (lambda i: (i % pos_tiles, 0)))
        grid_spec = pltpu.PrefetchScalarGridSpec(
            num_scalar_prefetch=0,
            grid=(m_tiles,),
            in_specs=[
                pl.BlockSpec((tm, K), lambda i: (i, 0)),
                pl.BlockSpec((K, E_pad), lambda i: (0, 0)),   # resident weight
                pl.BlockSpec((tm, E_pad), pos_map),
            ],
            out_specs=pl.BlockSpec((tm, E_pad), lambda i: (i, 0)),
        )
        kernel = _embed_kernel
        dims = ("parallel",)
    else:
        pos_map = ((lambda i, k: (0, 0)) if pos_tiles == 1
                   else (lambda i, k: (i % pos_tiles, 0)))
        grid_spec = pltpu.PrefetchScalarGridSpec(
            num_scalar_prefetch=0,
            grid=(m_tiles, k_tiles),
            in_specs=[
                pl.BlockSpec((tm, tk), lambda i, k: (i, k)),
                pl.BlockSpec((tk, E_pad), lambda i, k: (k, 0)),
                pl.BlockSpec((tm, E_pad), pos_map),
            ],
            out_specs=pl.BlockSpec((tm, E_pad), lambda i, k: (i, 0)),
            scratch_shapes=[pltpu.VMEM((tm, E_pad), jnp.float32)],
        )
        kernel = _embed_kernel_ktiled
        dims = ("parallel", "arbitrary")

    out_padded = pl.pallas_call(
        kernel,
        out_shape=jax.ShapeDtypeStruct((M, E_pad), x.dtype),
        grid_spec=grid_spec,
        compiler_params=pltpu.CompilerParams(
            dimension_semantics=dims,
            vmem_limit_bytes=vmem_limit,
        ),
    )(patches, w, pos_bias)

    out = out_padded if E_pad == E else out_padded[:, :E]
    return out.reshape(B, n_patches, E)


def reference_forward(x, conv_w, conv_b, pos_emb, patch_size):
    """Pure-JAX reference mirroring the PyTorch forward (eval mode)."""
    y = jax.lax.conv_general_dilated(
        x, conv_w,
        window_strides=(patch_size,) * 3,
        padding="VALID",
        dimension_numbers=("NCDHW", "OIDHW", "NCDHW"),
    ) + conv_b.reshape(1, -1, 1, 1, 1)
    B, E = y.shape[0], y.shape[1]
    y = y.reshape(B, E, -1)          # flatten(2)
    y = jnp.transpose(y, (0, 2, 1))  # transpose(-1, -2)
    return y + pos_emb               # dropout = identity (eval)


if __name__ == "__main__":
    # Small, module-consistent shapes.
    B = 2
    input_dim = 4
    embed_dim = 32
    cube_size = (16, 16, 16)
    patch_size = 8
    n_patches = (cube_size[0] * cube_size[1] * cube_size[2]) // (patch_size ** 3)  # 8

    key = jax.random.PRNGKey(0)
    kx, kw, kb = jax.random.split(key, 3)

    x = jax.random.normal(kx, (B, input_dim, *cube_size), dtype=jnp.float32)
    conv_w = 0.02 * jax.random.normal(
        kw, (embed_dim, input_dim, patch_size, patch_size, patch_size),
        dtype=jnp.float32,
    )
    conv_b = 0.01 * jax.random.normal(kb, (embed_dim,), dtype=jnp.float32)
    # nn.Parameter(torch.zeros(1, n_patches, embed_dim))
    pos_emb = jnp.zeros((1, n_patches, embed_dim), dtype=jnp.float32)

    fwd = jax.jit(functools.partial(embeddings_forward, patch_size=patch_size))
    out = fwd(x, conv_w, conv_b, pos_emb)
    out = jax.block_until_ready(out)

    ref = reference_forward(x, conv_w, conv_b, pos_emb, patch_size)
    assert out.shape == (B, n_patches, embed_dim), out.shape
    assert jnp.allclose(out, ref, atol=1e-4, rtol=1e-4), float(
        jnp.max(jnp.abs(out - ref))
    )
    print("KERNEL_OK")
</pallas_src>

<mosaic_0001>
module attributes {stable_mosaic.version = 11 : i64} {
  func.func @_embed_kernel(%arg0: i32, %arg1: memref<8x2048xf32, #tpu.memory_space<vmem>>, %arg2: memref<2048x128xf32, #tpu.memory_space<vmem>>, %arg3: memref<8x128xf32, #tpu.memory_space<vmem>>, %arg4: memref<8x128xf32, #tpu.memory_space<vmem>>) attributes {dimension_semantics = [#tpu.dimension_semantics<parallel>], iteration_bounds = array<i64: 2>, scalar_prefetch = 0 : i64, scratch_operands = 0 : i64, tpu.core_type = #tpu.core_type<tc>, window_params = [{transform_indices = @transform_0, window_bounds = array<i64: 8, 2048>}, {pipeline_mode = #tpu.pipeline_mode<synchronous>, transform_indices = @transform_1, window_bounds = array<i64: 2048, 128>}, {pipeline_mode = #tpu.pipeline_mode<synchronous>, transform_indices = @transform_2, window_bounds = array<i64: 8, 128>}, {transform_indices = @transform_3, window_bounds = array<i64: 8, 128>}]} {
    %c0 = arith.constant 0 : index
    %c0_0 = arith.constant 0 : index
    %0 = vector.load %arg1[%c0, %c0_0] : memref<8x2048xf32, #tpu.memory_space<vmem>>, vector<8x2048xf32>
    %c0_1 = arith.constant 0 : index
    %c0_2 = arith.constant 0 : index
    %1 = vector.load %arg2[%c0_1, %c0_2] : memref<2048x128xf32, #tpu.memory_space<vmem>>, vector<2048x128xf32>
    %cst = arith.constant dense<0.000000e+00> : vector<8x128xf32>
    %2 = tpu.matmul %0, %1, %cst {dimension_numbers = #tpu.dot_dimension_numbers<[1], [0], [0], [1], [0, 0, 1, 1], [], []>} : vector<8x2048xf32>, vector<2048x128xf32>, vector<8x128xf32> -> vector<8x128xf32>
    %c0_3 = arith.constant 0 : index
    %c0_4 = arith.constant 0 : index
    %3 = vector.load %arg3[%c0_3, %c0_4] : memref<8x128xf32, #tpu.memory_space<vmem>>, vector<8x128xf32>
    %4 = arith.addf %2, %3 : vector<8x128xf32>
    %c0_5 = arith.constant 0 : index
    %c0_6 = arith.constant 0 : index
    %5 = vector.load %arg4[%c0_5, %c0_6] : memref<8x128xf32, #tpu.memory_space<vmem>>, vector<8x128xf32>
    tpu.vector_store %arg4[%c0_5, %c0_6], %4 {strides = array<i32>} : memref<8x128xf32, #tpu.memory_space<vmem>>, vector<8x128xf32>,
    return
  }
  func.func @transform_0(%arg0: i32) -> (i32, i32) {
    %c0_i32 = arith.constant 0 : i32
    %c0_i32_0 = arith.constant 0 : i32
    return %arg0, %c0_i32 : i32, i32
  }
  func.func @transform_1(%arg0: i32) -> (i32, i32) {
    %c0_i32 = arith.constant 0 : i32
    %c0_i32_0 = arith.constant 0 : i32
    %c0_i32_1 = arith.constant 0 : i32
    return %c0_i32, %c0_i32_0 : i32, i32
  }
  func.func @transform_2(%arg0: i32) -> (i32, i32) {
    %c0_i32 = arith.constant 0 : i32
    %c0_i32_0 = arith.constant 0 : i32
    %c0_i32_1 = arith.constant 0 : i32
    return %c0_i32, %c0_i32_0 : i32, i32
  }
  func.func @transform_3(%arg0: i32) -> (i32, i32) {
    %c0_i32 = arith.constant 0 : i32
    %c0_i32_0 = arith.constant 0 : i32
    return %arg0, %c0_i32 : i32, i32
  }
}

</mosaic_0001>

<llo_original>
// kernel: embeddings_forward.1
$region0: #{embeddings_forward.1}
  #allocation0 [shape = 'u32[]', space=smem, size = 0x4, offset = 0x4, fixed_abs, tag = 'smem constant byte address 0x4 - core index']
  #allocation1 [shape = 'u32[144,128]{1,0:T(1,128)}', space=vmem, size = 0x12000, scoped, tag = 'internal scratch']
  %s0 = inlined_call_operand.vmem [shape: f32[16,2048], index: 0, kind: input, shape index: {}]
  %s1 = inlined_call_operand.vmem [shape: f32[2048,128], index: 1, kind: input, shape index: {}]
  %s2 = inlined_call_operand.vmem [shape: f32[8,128], index: 2, kind: input, shape index: {}]
  %s3 = inlined_call_operand.vmem [shape: f32[16,128], index: 3, kind: output, shape index: {}]
  %s4 = sld [smem:[#allocation0]]
  $region45: #{embeddings_forward.1} parent=0
    _
  %s6 = ssub.s32 1, %s4
  %s7 = scalar_select 0, %s6, %s4
  loop: start=0, step=1, limit=4
  $region2: #{embeddings_forward.1} parent=0 // loop_pre_header
    _
  $region3: #{embeddings_forward.1} parent=0 // loop_header
    %s9 = sphi 0, %s13
    %p10 = scmp.ge.s32.totalorder %s9, 4
    %s19 = sphi 0, %s21
    %s22 = sphi 0, %s19
    %s23 = sphi 0, %s22
    %s39 = sphi 0, %s23
    %s43 = sphi 0, %s43
    %s45 = sphi 0, %s43
    %s46 = sphi 0, %s45
    %s60 = sphi 0, %s46
    %s64 = sphi 0, %s64
    %s66 = sphi 0, %s64
    %s67 = sphi 0, %s66
    %s81 = sphi 0, %s67
    %s87 = sphi 0, %s89
    %s90 = sphi 0, %s87
    %s91 = sphi 0, %s90
    %s107 = sphi 0, %s91
  $region4: #{embeddings_forward.1} parent=0 // loop_header_branch
    %12 = sbr.rel (%p10) target = $region8
  $region5: #{embeddings_forward.1} parent=0 // loop_body
    %s14 = ssub.s32 %s9, 1
    %s15 = ssub.s32 %s9, 2
    %s16 = sadd.s32 %s9, 1
    %s17 = ssub.s32 %s9, %s16
    %p18 = scmp.eq.s32.totalorder %s17, 0
    %s20 = sadd.s32 %s19, 1
    %s21 = scalar_select %p18, %s19, %s20
    %p24 = pneg %p18
    %p25 = scmp.eq.s32.totalorder %s9, 1
    %p26 = por %p24, %p25
    %p27 = scmp.ne.s32.totalorder %s19, %s22
    %p28 = scmp.eq.s32.totalorder %s9, 0
    %p29 = por %p27, %p28
    %p30 = scmp.ne.s32.totalorder %s19, %s22
    %p31 = scmp.eq.s32.totalorder %s14, 1
    %p32 = por %p30, %p31
    %p33 = scmp.ne.s32.totalorder %s22, %s23
    %p34 = scmp.eq.s32.totalorder %s14, 0
    %p35 = por %p33, %p34
    %p36 = scmp.ne.s32.totalorder %s22, %s23
    %p37 = scmp.eq.s32.totalorder %s15, 1
    %p38 = por %p36, %p37
    %p40 = scmp.ne.s32.totalorder %s23, %s39
    %p41 = scmp.eq.s32.totalorder %s15, 0
    %p42 = por %p40, %p41
    %s44 = sadd.s32 %s43, 1
    %p47 = scmp.eq.s32.totalorder %s9, 1
    %p48 = scmp.ne.s32.totalorder %s43, %s45
    %p49 = scmp.eq.s32.totalorder %s9, 0
    %p50 = por %p48, %p49
    %p51 = scmp.ne.s32.totalorder %s43, %s45
    %p52 = scmp.eq.s32.totalorder %s14, 1
    %p53 = por %p51, %p52
    %p54 = scmp.ne.s32.totalorder %s45, %s46
    %p55 = scmp.eq.s32.totalorder %s14, 0
    %p56 = por %p54, %p55
    %p57 = scmp.ne.s32.totalorder %s45, %s46
    %p58 = scmp.eq.s32.totalorder %s15, 1
    %p59 = por %p57, %p58
    %p61 = scmp.ne.s32.totalorder %s46, %s60
    %p62 = scmp.eq.s32.totalorder %s15, 0
    %p63 = por %p61, %p62
    %s65 = sadd.s32 %s64, 1
    %p68 = scmp.eq.s32.totalorder %s9, 1
    %p69 = scmp.ne.s32.totalorder %s64, %s66
    %p70 = scmp.eq.s32.totalorder %s9, 0
    %p71 = por %p69, %p70
    %p72 = scmp.ne.s32.totalorder %s64, %s66
    %p73 = scmp.eq.s32.totalorder %s14, 1
    %p74 = por %p72, %p73
    %p75 = scmp.ne.s32.totalorder %s66, %s67
    %p76 = scmp.eq.s32.totalorder %s14, 0
    %p77 = por %p75, %p76
    %p78 = scmp.ne.s32.totalorder %s66, %s67
    %p79 = scmp.eq.s32.totalorder %s15, 1
    %p80 = por %p78, %p79
    %p82 = scmp.ne.s32.totalorder %s67, %s81
    %p83 = scmp.eq.s32.totalorder %s15, 0
    %p84 = por %p82, %p83
    %s85 = ssub.s32 %s9, %s16
    %p86 = scmp.eq.s32.totalorder %s85, 0
    %s88 = sadd.s32 %s87, 1
    %s89 = scalar_select %p86, %s87, %s88
    %p92 = pneg %p86
    %p93 = scmp.eq.s32.totalorder %s9, 1
    %p94 = por %p92, %p93
    %p95 = scmp.ne.s32.totalorder %s87, %s90
    %p96 = scmp.eq.s32.totalorder %s9, 0
    %p97 = por %p95, %p96
    %p98 = scmp.ne.s32.totalorder %s87, %s90
    %p99 = scmp.eq.s32.totalorder %s14, 1
    %p100 = por %p98, %p99
    %p101 = scmp.ne.s32.totalorder %s90, %s91
    %p102 = scmp.eq.s32.totalorder %s14, 0
    %p103 = por %p101, %p102
    %p104 = scmp.ne.s32.totalorder %s90, %s91
    %p105 = scmp.eq.s32.totalorder %s15, 1
    %p106 = por %p104, %p105
    %p108 = scmp.ne.s32.totalorder %s91, %s107
    %p109 = scmp.eq.s32.totalorder %s15, 0
    %p110 = por %p108, %p109
    %p111 = scmp.le.s32.totalorder 1, %s9
    %p112 = scmp.lt.s32.totalorder %s9, 3
    %p113 = pnand %p111, %p112
    %p114 = pneg %p113
    // Predicated region
    $region9: #{embeddings_forward.1} parent=5 // pred_check
      _
    $region10: #{embeddings_forward.1} parent=5 // pred_check_branch
      %116 = sbr.rel (%p113) target = $region12
    $region11: #{embeddings_forward.1} parent=5 // pred_region
      %s117 = ssub.s32 %s9, 1
      // Predicated region
      $region13: #{embeddings_forward.1} parent=11 // pred_check
        %p118 = pneg %p56
      $region14: #{embeddings_forward.1} parent=11 // pred_check_branch
        %120 = sbr.rel (%p118) target = $region16
      $region15: #{embeddings_forward.1} parent=11 // pred_region
        _
      $region16: #{embeddings_forward.1} parent=11 // pred_fallthru
        _
      // Predicated region
      $region17: #{embeddings_forward.1} parent=11 // pred_check
        %p121 = pneg %p77
      $region18: #{embeddings_forward.1} parent=11 // pred_check_branch
        %123 = sbr.rel (%p121) target = $region20
      $region19: #{embeddings_forward.1} parent=11 // pred_region
        _
      $region20: #{embeddings_forward.1} parent=11 // pred_fallthru
        _
    $region12: #{embeddings_forward.1} parent=5 // pred_fallthru
      _
    %p124 = scmp.lt.s32.totalorder %s9, 2
    // Predicated region
    $region21: #{embeddings_forward.1} parent=5 // pred_check
      %p125 = pneg %p124
    $region22: #{embeddings_forward.1} parent=5 // pred_check_branch
      %127 = sbr.rel (%p125) target = $region24
    $region23: #{embeddings_forward.1} parent=5 // pred_region
      // Predicated region
      $region25: #{embeddings_forward.1} parent=23 // pred_check
        %p128 = pneg %p29
      $region26: #{embeddings_forward.1} parent=23 // pred_check_branch
        %130 = sbr.rel (%p128) target = $region28
      $region27: #{embeddings_forward.1} parent=23 // pred_region
        %p131 = scmp.lt.s32.totalorder %s9, 1
        %s132 = scalar_select %p131, %s9, 1
        %s133 = smul.addr %s132, 16
        %s134 = smul.addr %s133, 8
        %s135 = scalar_lea.vmem %s0, %s134
      $region28: #{embeddings_forward.1} parent=23 // pred_fallthru
        _
    $region24: #{embeddings_forward.1} parent=5 // pred_fallthru
      _
    %p136 = scmp.le.s32.totalorder 1, %s9
    %p137 = scmp.lt.s32.totalorder %s9, 3
    %p138 = pnand %p136, %p137
    %p139 = pneg %p138
    // Predicated region
    $region29: #{embeddings_forward.1} parent=5 // pred_check
      _
    $region30: #{embeddings_forward.1} parent=5 // pred_check_branch
      %141 = sbr.rel (%p138) target = $region32
    $region31: #{embeddings_forward.1} parent=5 // pred_region
      %s142 = ssub.s32 %s9, 1
      %p143 = scmp.lt.s32.totalorder %s14, 1
      %s144 = scalar_select %p143, %s14, 1
      %s145 = smul.addr %s144, 16
      %s146 = smul.addr %s145, 8
      %s147 = scalar_lea.vmem %s0, %s146
      %p148 = pneg %p35
      %p149 = pneg %p32
      %p150 = pneg %p56
      %p151 = pneg %p53
      %p152 = pneg %p77
      %p153 = pneg %p74
      %p154 = pneg %p103
      %p155 = pneg %p100
      %p156 = scmp.lt.s32.totalorder %s14, 1
      %s157 = scalar_select %p156, %s14, 1
      %s158 = smul.addr %s157, 8
      %s159 = scalar_lea.vmem %s3, %s158
      %p160 = scmp.lt.s32.totalorder %s14, 1
      %s161 = scalar_select %p160, %s14, 1
      %s162 = smul.addr %s161, 16
      %s163 = smul.addr %s162, 8
      %s164 = scalar_lea.vmem %s0, %s163
      %p165 = scmp.lt.s32.totalorder %s14, 1
      %s166 = scalar_select %p165, %s14, 1
      %s167 = smul.addr %s166, 8
      %s168 = scalar_lea.vmem %s3, %s167
      %v169 = vld [vmem:[%s164] sm:$0xff]
      %v170 = vld [vmem:[%s164 + $0x8] sm:$0xff]
      %v171 = vld [vmem:[%s164 + $0x10] sm:$0xff]
      %v172 = vld [vmem:[%s164 + $0x18] sm:$0xff]
      %v173 = vld [vmem:[%s164 + $0x20] sm:$0xff]
      %v174 = vld [vmem:[%s164 + $0x28] sm:$0xff]
      %v175 = vld [vmem:[%s164 + $0x30] sm:$0xff]
      %v176 = vld [vmem:[%s164 + $0x38] sm:$0xff]
      %v177 = vld [vmem:[%s164 + $0x40] sm:$0xff]
      %v178 = vld [vmem:[%s164 + $0x48] sm:$0xff]
      %v179 = vld [vmem:[%s164 + $0x50] sm:$0xff]
      %v180 = vld [vmem:[%s164 + $0x58] sm:$0xff]
      %v181 = vld [vmem:[%s164 + $0x60] sm:$0xff]
      %v182 = vld [vmem:[%s164 + $0x68] sm:$0xff]
      %v183 = vld [vmem:[%s164 + $0x70] sm:$0xff]
      %v184 = vld [vmem:[%s164 + $0x78] sm:$0xff]
      %v185 = vld [vmem:[%s1] sm:$0xff]
      %v186 = vld [vmem:[%s1 + $0x8] sm:$0xff]
      %v187 = vld [vmem:[%s1 + $0x10] sm:$0xff]
      %v188 = vld [vmem:[%s1 + $0x18] sm:$0xff]
      %v189 = vld [vmem:[%s1 + $0x20] sm:$0xff]
      %v190 = vld [vmem:[%s1 + $0x28] sm:$0xff]
      %v191 = vld [vmem:[%s1 + $0x30] sm:$0xff]
      %v192 = vld [vmem:[%s1 + $0x38] sm:$0xff]
      %v193 = vld [vmem:[%s1 + $0x40] sm:$0xff]
      %v194 = vld [vmem:[%s1 + $0x48] sm:$0xff]
      %v195 = vld [vmem:[%s1 + $0x50] sm:$0xff]
      %v196 = vld [vmem:[%s1 + $0x58] sm:$0xff]
      %v197 = vld [vmem:[%s1 + $0x60] sm:$0xff]
      %v198 = vld [vmem:[%s1 + $0x68] sm:$0xff]
      %v199 = vld [vmem:[%s1 + $0x70] sm:$0xff]
      %v200 = vld [vmem:[%s1 + $0x78] sm:$0xff]
      %v201 = vld [vmem:[%s1 + $0x80] sm:$0xff]
      %v202 = vld [vmem:[%s1 + $0x88] sm:$0xff]
      %v203 = vld [vmem:[%s1 + $0x90] sm:$0xff]
      %v204 = vld [vmem:[%s1 + $0x98] sm:$0xff]
      %v205 = vld [vmem:[%s1 + $0xa0] sm:$0xff]
      %v206 = vld [vmem:[%s1 + $0xa8] sm:$0xff]
      %v207 = vld [vmem:[%s1 + $0xb0] sm:$0xff]
      %v208 = vld [vmem:[%s1 + $0xb8] sm:$0xff]
      %v209 = vld [vmem:[%s1 + $0xc0] sm:$0xff]
      %v210 = vld [vmem:[%s1 + $0xc8] sm:$0xff]
      %v211 = vld [vmem:[%s1 + $0xd0] sm:$0xff]
      %v212 = vld [vmem:[%s1 + $0xd8] sm:$0xff]
      %v213 = vld [vmem:[%s1 + $0xe0] sm:$0xff]
      %v214 = vld [vmem:[%s1 + $0xe8] sm:$0xff]
      %v215 = vld [vmem:[%s1 + $0xf0] sm:$0xff]
      %v216 = vld [vmem:[%s1 + $0xf8] sm:$0xff]
      %v217 = vld [vmem:[%s1 + $0x100] sm:$0xff]
      %v218 = vld [vmem:[%s1 + $0x108] sm:$0xff]
      %v219 = vld [vmem:[%s1 + $0x110] sm:$0xff]
      %v220 = vld [vmem:[%s1 + $0x118] sm:$0xff]
      %v221 = vld [vmem:[%s1 + $0x120] sm:$0xff]
      %v222 = vld [vmem:[%s1 + $0x128] sm:$0xff]
      %v223 = vld [vmem:[%s1 + $0x130] sm:$0xff]
      %v224 = vld [vmem:[%s1 + $0x138] sm:$0xff]
      %v225 = vld [vmem:[%s1 + $0x140] sm:$0xff]
      %v226 = vld [vmem:[%s1 + $0x148] sm:$0xff]
      %v227 = vld [vmem:[%s1 + $0x150] sm:$0xff]
      %v228 = vld [vmem:[%s1 + $0x158] sm:$0xff]
      %v229 = vld [vmem:[%s1 + $0x160] sm:$0xff]
      %v230 = vld [vmem:[%s1 + $0x168] sm:$0xff]
      %v231 = vld [vmem:[%s1 + $0x170] sm:$0xff]
      %v232 = vld [vmem:[%s1 + $0x178] sm:$0xff]
      %v233 = vld [vmem:[%s1 + $0x180] sm:$0xff]
      %v234 = vld [vmem:[%s1 + $0x188] sm:$0xff]
      %v235 = vld [vmem:[%s1 + $0x190] sm:$0xff]
      %v236 = vld [vmem:[%s1 + $0x198] sm:$0xff]
      %v237 = vld [vmem:[%s1 + $0x1a0] sm:$0xff]
      %v238 = vld [vmem:[%s1 + $0x1a8] sm:$0xff]
      %v239 = vld [vmem:[%s1 + $0x1b0] sm:$0xff]
      %v240 = vld [vmem:[%s1 + $0x1b8] sm:$0xff]
      %v241 = vld [vmem:[%s1 + $0x1c0] sm:$0xff]
      %v242 = vld [vmem:[%s1 + $0x1c8] sm:$0xff]
      %v243 = vld [vmem:[%s1 + $0x1d0] sm:$0xff]
      %v244 = vld [vmem:[%s1 + $0x1d8] sm:$0xff]
      %v245 = vld [vmem:[%s1 + $0x1e0] sm:$0xff]
      %v246 = vld [vmem:[%s1 + $0x1e8] sm:$0xff]
      %v247 = vld [vmem:[%s1 + $0x1f0] sm:$0xff]
      %v248 = vld [vmem:[%s1 + $0x1f8] sm:$0xff]
      %v249 = vld [vmem:[%s1 + $0x200] sm:$0xff]
      %v250 = vld [vmem:[%s1 + $0x208] sm:$0xff]
      %v251 = vld [vmem:[%s1 + $0x210] sm:$0xff]
      %v252 = vld [vmem:[%s1 + $0x218] sm:$0xff]
      %v253 = vld [vmem:[%s1 + $0x220] sm:$0xff]
      %v254 = vld [vmem:[%s1 + $0x228] sm:$0xff]
      %v255 = vld [vmem:[%s1 + $0x230] sm:$0xff]
      %v256 = vld [vmem:[%s1 + $0x238] sm:$0xff]
      %v257 = vld [vmem:[%s1 + $0x240] sm:$0xff]
      %v258 = vld [vmem:[%s1 + $0x248] sm:$0xff]
      %v259 = vld [vmem:[%s1 + $0x250] sm:$0xff]
      %v260 = vld [vmem:[%s1 + $0x258] sm:$0xff]
      %v261 = vld [vmem:[%s1 + $0x260] sm:$0xff]
      %v262 = vld [vmem:[%s1 + $0x268] sm:$0xff]
      %v263 = vld [vmem:[%s1 + $0x270] sm:$0xff]
      %v264 = vld [vmem:[%s1 + $0x278] sm:$0xff]
      %v265 = vld [vmem:[%s1 + $0x280] sm:$0xff]
      %v266 = vld [vmem:[%s1 + $0x288] sm:$0xff]
      %v267 = vld [vmem:[%s1 + $0x290] sm:$0xff]
      %v268 = vld [vmem:[%s1 + $0x298] sm:$0xff]
      %v269 = vld [vmem:[%s1 + $0x2a0] sm:$0xff]
      %v270 = vld [vmem:[%s1 + $0x2a8] sm:$0xff]
      %v271 = vld [vmem:[%s1 + $0x2b0] sm:$0xff]
      %v272 = vld [vmem:[%s1 + $0x2b8] sm:$0xff]
      %v273 = vld [vmem:[%s1 + $0x2c0] sm:$0xff]
      %v274 = vld [vmem:[%s1 + $0x2c8] sm:$0xff]
      %v275 = vld [vmem:[%s1 + $0x2d0] sm:$0xff]
      %v276 = vld [vmem:[%s1 + $0x2d8] sm:$0xff]
      %v277 = vld [vmem:[%s1 + $0x2e0] sm:$0xff]
      %v278 = vld [vmem:[%s1 + $0x2e8] sm:$0xff]
      %v279 = vld [vmem:[%s1 + $0x2f0] sm:$0xff]
      %v280 = vld [vmem:[%s1 + $0x2f8] sm:$0xff]
      %v281 = vld [vmem:[%s1 + $0x300] sm:$0xff]
      %v282 = vld [vmem:[%s1 + $0x308] sm:$0xff]
      %v283 = vld [vmem:[%s1 + $0x310] sm:$0xff]
      %v284 = vld [vmem:[%s1 + $0x318] sm:$0xff]
      %v285 = vld [vmem:[%s1 + $0x320] sm:$0xff]
      %v286 = vld [vmem:[%s1 + $0x328] sm:$0xff]
      %v287 = vld [vmem:[%s1 + $0x330] sm:$0xff]
      %v288 = vld [vmem:[%s1 + $0x338] sm:$0xff]
      %v289 = vld [vmem:[%s1 + $0x340] sm:$0xff]
      %v290 = vld [vmem:[%s1 + $0x348] sm:$0xff]
      %v291 = vld [vmem:[%s1 + $0x350] sm:$0xff]
      %v292 = vld [vmem:[%s1 + $0x358] sm:$0xff]
      %v293 = vld [vmem:[%s1 + $0x360] sm:$0xff]
      %v294 = vld [vmem:[%s1 + $0x368] sm:$0xff]
      %v295 = vld [vmem:[%s1 + $0x370] sm:$0xff]
      %v296 = vld [vmem:[%s1 + $0x378] sm:$0xff]
      %v297 = vld [vmem:[%s1 + $0x380] sm:$0xff]
      %v298 = vld [vmem:[%s1 + $0x388] sm:$0xff]
      %v299 = vld [vmem:[%s1 + $0x390] sm:$0xff]
      %v300 = vld [vmem:[%s1 + $0x398] sm:$0xff]
      %v301 = vld [vmem:[%s1 + $0x3a0] sm:$0xff]
      %v302 = vld [vmem:[%s1 + $0x3a8] sm:$0xff]
      %v303 = vld [vmem:[%s1 + $0x3b0] sm:$0xff]
      %v304 = vld [vmem:[%s1 + $0x3b8] sm:$0xff]
      %v305 = vld [vmem:[%s1 + $0x3c0] sm:$0xff]
      %v306 = vld [vmem:[%s1 + $0x3c8] sm:$0xff]
      %v307 = vld [vmem:[%s1 + $0x3d0] sm:$0xff]
      %v308 = vld [vmem:[%s1 + $0x3d8] sm:$0xff]
      %v309 = vld [vmem:[%s1 + $0x3e0] sm:$0xff]
      %v310 = vld [vmem:[%s1 + $0x3e8] sm:$0xff]
      %v311 = vld [vmem:[%s1 + $0x3f0] sm:$0xff]
      %v312 = vld [vmem:[%s1 + $0x3f8] sm:$0xff]
      %v313 = vld [vmem:[%s1 + $0x400] sm:$0xff]
      %v314 = vld [vmem:[%s1 + $0x408] sm:$0xff]
      %v315 = vld [vmem:[%s1 + $0x410] sm:$0xff]
      %v316 = vld [vmem:[%s1 + $0x418] sm:$0xff]
      %v317 = vld [vmem:[%s1 + $0x420] sm:$0xff]
      %v318 = vld [vmem:[%s1 + $0x428] sm:$0xff]
      %v319 = vld [vmem:[%s1 + $0x430] sm:$0xff]
      %v320 = vld [vmem:[%s1 + $0x438] sm:$0xff]
      %v321 = vld [vmem:[%s1 + $0x440] sm:$0xff]
      %v322 = vld [vmem:[%s1 + $0x448] sm:$0xff]
      %v323 = vld [vmem:[%s1 + $0x450] sm:$0xff]
      %v324 = vld [vmem:[%s1 + $0x458] sm:$0xff]
      %v325 = vld [vmem:[%s1 + $0x460] sm:$0xff]
      %v326 = vld [vmem:[%s1 + $0x468] sm:$0xff]
      %v327 = vld [vmem:[%s1 + $0x470] sm:$0xff]
      %v328 = vld [vmem:[%s1 + $0x478] sm:$0xff]
      %v329 = vld [vmem:[%s1 + $0x480] sm:$0xff]
      %v330 = vld [vmem:[%s1 + $0x488] sm:$0xff]
      %v331 = vld [vmem:[%s1 + $0x490] sm:$0xff]
      %v332 = vld [vmem:[%s1 + $0x498] sm:$0xff]
      %v333 = vld [vmem:[%s1 + $0x4a0] sm:$0xff]
      %v334 = vld [vmem:[%s1 + $0x4a8] sm:$0xff]
      %v335 = vld [vmem:[%s1 + $0x4b0] sm:$0xff]
      %v336 = vld [vmem:[%s1 + $0x4b8] sm:$0xff]
      %v337 = vld [vmem:[%s1 + $0x4c0] sm:$0xff]
      %v338 = vld [vmem:[%s1 + $0x4c8] sm:$0xff]
      %v339 = vld [vmem:[%s1 + $0x4d0] sm:$0xff]
      %v340 = vld [vmem:[%s1 + $0x4d8] sm:$0xff]
      %v341 = vld [vmem:[%s1 + $0x4e0] sm:$0xff]
      %v342 = vld [vmem:[%s1 + $0x4e8] sm:$0xff]
      %v343 = vld [vmem:[%s1 + $0x4f0] sm:$0xff]
      %v344 = vld [vmem:[%s1 + $0x4f8] sm:$0xff]
      %v345 = vld [vmem:[%s1 + $0x500] sm:$0xff]
      %v346 = vld [vmem:[%s1 + $0x508] sm:$0xff]
      %v347 = vld [vmem:[%s1 + $0x510] sm:$0xff]
      %v348 = vld [vmem:[%s1 + $0x518] sm:$0xff]
      %v349 = vld [vmem:[%s1 + $0x520] sm:$0xff]
      %v350 = vld [vmem:[%s1 + $0x528] sm:$0xff]
      %v351 = vld [vmem:[%s1 + $0x530] sm:$0xff]
      %v352 = vld [vmem:[%s1 + $0x538] sm:$0xff]
      %v353 = vld [vmem:[%s1 + $0x540] sm:$0xff]
      %v354 = vld [vmem:[%s1 + $0x548] sm:$0xff]
      %v355 = vld [vmem:[%s1 + $0x550] sm:$0xff]
      %v356 = vld [vmem:[%s1 + $0x558] sm:$0xff]
      %v357 = vld [vmem:[%s1 + $0x560] sm:$0xff]
      %v358 = vld [vmem:[%s1 + $0x568] sm:$0xff]
      %v359 = vld [vmem:[%s1 + $0x570] sm:$0xff]
      %v360 = vld [vmem:[%s1 + $0x578] sm:$0xff]
      %v361 = vld [vmem:[%s1 + $0x580] sm:$0xff]
      %v362 = vld [vmem:[%s1 + $0x588] sm:$0xff]
      %v363 = vld [vmem:[%s1 + $0x590] sm:$0xff]
      %v364 = vld [vmem:[%s1 + $0x598] sm:$0xff]
      %v365 = vld [vmem:[%s1 + $0x5a0] sm:$0xff]
      %v366 = vld [vmem:[%s1 + $0x5a8] sm:$0xff]
      %v367 = vld [vmem:[%s1 + $0x5b0] sm:$0xff]
      %v368 = vld [vmem:[%s1 + $0x5b8] sm:$0xff]
      %v369 = vld [vmem:[%s1 + $0x5c0] sm:$0xff]
      %v370 = vld [vmem:[%s1 + $0x5c8] sm:$0xff]
      %v371 = vld [vmem:[%s1 + $0x5d0] sm:$0xff]
      %v372 = vld [vmem:[%s1 + $0x5d8] sm:$0xff]
      %v373 = vld [vmem:[%s1 + $0x5e0] sm:$0xff]
      %v374 = vld [vmem:[%s1 + $0x5e8] sm:$0xff]
      %v375 = vld [vmem:[%s1 + $0x5f0] sm:$0xff]
      %v376 = vld [vmem:[%s1 + $0x5f8] sm:$0xff]
      %v377 = vld [vmem:[%s1 + $0x600] sm:$0xff]
      %v378 = vld [vmem:[%s1 + $0x608] sm:$0xff]
      %v379 = vld [vmem:[%s1 + $0x610] sm:$0xff]
      %v380 = vld [vmem:[%s1 + $0x618] sm:$0xff]
      %v381 = vld [vmem:[%s1 + $0x620] sm:$0xff]
      %v382 = vld [vmem:[%s1 + $0x628] sm:$0xff]
      %v383 = vld [vmem:[%s1 + $0x630] sm:$0xff]
      %v384 = vld [vmem:[%s1 + $0x638] sm:$0xff]
      %v385 = vld [vmem:[%s1 + $0x640] sm:$0xff]
      %v386 = vld [vmem:[%s1 + $0x648] sm:$0xff]
      %v387 = vld [vmem:[%s1 + $0x650] sm:$0xff]
      %v388 = vld [vmem:[%s1 + $0x658] sm:$0xff]
      %v389 = vld [vmem:[%s1 + $0x660] sm:$0xff]
      %v390 = vld [vmem:[%s1 + $0x668] sm:$0xff]
      %v391 = vld [vmem:[%s1 + $0x670] sm:$0xff]
      %v392 = vld [vmem:[%s1 + $0x678] sm:$0xff]
      %v393 = vld [vmem:[%s1 + $0x680] sm:$0xff]
      %v394 = vld [vmem:[%s1 + $0x688] sm:$0xff]
      %v395 = vld [vmem:[%s1 + $0x690] sm:$0xff]
      %v396 = vld [vmem:[%s1 + $0x698] sm:$0xff]
      %v397 = vld [vmem:[%s1 + $0x6a0] sm:$0xff]
      %v398 = vld [vmem:[%s1 + $0x6a8] sm:$0xff]
      %v399 = vld [vmem:[%s1 + $0x6b0] sm:$0xff]
      %v400 = vld [vmem:[%s1 + $0x6b8] sm:$0xff]
      %v401 = vld [vmem:[%s1 + $0x6c0] sm:$0xff]
      %v402 = vld [vmem:[%s1 + $0x6c8] sm:$0xff]
      %v403 = vld [vmem:[%s1 + $0x6d0] sm:$0xff]
      %v404 = vld [vmem:[%s1 + $0x6d8] sm:$0xff]
      %v405 = vld [vmem:[%s1 + $0x6e0] sm:$0xff]
      %v406 = vld [vmem:[%s1 + $0x6e8] sm:$0xff]
      %v407 = vld [vmem:[%s1 + $0x6f0] sm:$0xff]
      %v408 = vld [vmem:[%s1 + $0x6f8] sm:$0xff]
      %v409 = vld [vmem:[%s1 + $0x700] sm:$0xff]
      %v410 = vld [vmem:[%s1 + $0x708] sm:$0xff]
      %v411 = vld [vmem:[%s1 + $0x710] sm:$0xff]
      %v412 = vld [vmem:[%s1 + $0x718] sm:$0xff]
      %v413 = vld [vmem:[%s1 + $0x720] sm:$0xff]
      %v414 = vld [vmem:[%s1 + $0x728] sm:$0xff]
      %v415 = vld [vmem:[%s1 + $0x730] sm:$0xff]
      %v416 = vld [vmem:[%s1 + $0x738] sm:$0xff]
      %v417 = vld [vmem:[%s1 + $0x740] sm:$0xff]
      %v418 = vld [vmem:[%s1 + $0x748] sm:$0xff]
      %v419 = vld [vmem:[%s1 + $0x750] sm:$0xff]
      %v420 = vld [vmem:[%s1 + $0x758] sm:$0xff]
      %v421 = vld [vmem:[%s1 + $0x760] sm:$0xff]
      %v422 = vld [vmem:[%s1 + $0x768] sm:$0xff]
      %v423 = vld [vmem:[%s1 + $0x770] sm:$0xff]
      %v424 = vld [vmem:[%s1 + $0x778] sm:$0xff]
      %v425 = vld [vmem:[%s1 + $0x780] sm:$0xff]
      %v426 = vld [vmem:[%s1 + $0x788] sm:$0xff]
      %v427 = vld [vmem:[%s1 + $0x790] sm:$0xff]
      %v428 = vld [vmem:[%s1 + $0x798] sm:$0xff]
      %v429 = vld [vmem:[%s1 + $0x7a0] sm:$0xff]
      %v430 = vld [vmem:[%s1 + $0x7a8] sm:$0xff]
      %v431 = vld [vmem:[%s1 + $0x7b0] sm:$0xff]
      %v432 = vld [vmem:[%s1 + $0x7b8] sm:$0xff]
      %v433 = vld [vmem:[%s1 + $0x7c0] sm:$0xff]
      %v434 = vld [vmem:[%s1 + $0x7c8] sm:$0xff]
      %v435 = vld [vmem:[%s1 + $0x7d0] sm:$0xff]
      %v436 = vld [vmem:[%s1 + $0x7d8] sm:$0xff]
      %v437 = vld [vmem:[%s1 + $0x7e0] sm:$0xff]
      %v438 = vld [vmem:[%s1 + $0x7e8] sm:$0xff]
      %v439 = vld [vmem:[%s1 + $0x7f0] sm:$0xff]
      %v440 = vld [vmem:[%s1 + $0x7f8] sm:$0xff]
      %v441 = vld [vmem:[%s2] sm:$0xff]
      %442 = vmatprep.subr.mxu0 0.0
      %443 = vmatpush1.msra.mxu0 %v200
      %444 = vmatprep.subr.mxu0 0.0
      %445 = vmatpush1.msra.mxu0 %v199
      %446 = vmatprep.subr.mxu0 0.0
      %447 = vmatpush1.msra.mxu0 %v198
      %448 = vmatprep.subr.mxu0 0.0
      %449 = vmatpush1.msra.mxu0 %v197
      %450 = vmatprep.subr.mxu0 0.0
      %451 = vmatpush1.msra.mxu0 %v196
      %452 = vmatprep.subr.mxu0 0.0
      %453 = vmatpush1.msra.mxu0 %v195
      %454 = vmatprep.subr.mxu0 0.0
      %455 = vmatpush1.msra.mxu0 %v194
      %456 = vmatprep.subr.mxu0 0.0
      %457 = vmatpush1.msra.mxu0 %v193
      %458 = vmatprep.subr.mxu0 0.0
      %459 = vmatpush1.msra.mxu0 %v192
      %460 = vmatprep.subr.mxu0 0.0
      %461 = vmatpush1.msra.mxu0 %v191
      %462 = vmatprep.subr.mxu0 0.0
      %463 = vmatpush1.msra.mxu0 %v190
      %464 = vmatprep.subr.mxu0 0.0
      %465 = vmatpush1.msra.mxu0 %v189
      %466 = vmatprep.subr.mxu0 0.0
      %467 = vmatpush1.msra.mxu0 %v188
      %468 = vmatprep.subr.mxu0 0.0
      %469 = vmatpush1.msra.mxu0 %v187
      %470 = vmatprep.subr.mxu0 0.0
      %471 = vmatpush1.msra.mxu0 %v186
      %472 = vmatprep.subr.mxu0 0.0
      %473 = vmatpush1.msra.mxu0 %v185
      %474 = vmatprep.subr.mxu0 0.0
      %475 = vmatpush2.msra.mxu0 %v216
      %476 = vmatprep.subr.mxu0 0.0
      %477 = vmatpush2.msra.mxu0 %v215
      %478 = vmatprep.subr.mxu0 0.0
      %479 = vmatpush2.msra.mxu0 %v214
      %480 = vmatprep.subr.mxu0 0.0
      %481 = vmatpush2.msra.mxu0 %v213
      %482 = vmatprep.subr.mxu0 0.0
      %483 = vmatpush2.msra.mxu0 %v212
      %484 = vmatprep.subr.mxu0 0.0
      %485 = vmatpush2.msra.mxu0 %v211
      %486 = vmatprep.subr.mxu0 0.0
      %487 = vmatpush2.msra.mxu0 %v210
      %488 = vmatprep.subr.mxu0 0.0
      %489 = vmatpush2.msra.mxu0 %v209
      %490 = vmatprep.subr.mxu0 0.0
      %491 = vmatpush2.msra.mxu0 %v208
      %492 = vmatprep.subr.mxu0 0.0
      %493 = vmatpush2.msra.mxu0 %v207
      %494 = vmatprep.subr.mxu0 0.0
      %495 = vmatpush2.msra.mxu0 %v206
      %496 = vmatprep.subr.mxu0 0.0
      %497 = vmatpush2.msra.mxu0 %v205
      %498 = vmatprep.subr.mxu0 0.0
      %499 = vmatpush2.msra.mxu0 %v204
      %500 = vmatprep.subr.mxu0 0.0
      %501 = vmatpush2.msra.mxu0 %v203
      %502 = vmatprep.subr.mxu0 0.0
      %503 = vmatpush2.msra.mxu0 %v202
      %504 = vmatprep.subr.mxu0 0.0
      %505 = vmatpush2.msra.mxu0 %v201
      %506 = vmatprep.mubr.f32.mxu0 %v170
      %507 = vmatmul.mubr.f32.gmra.mxu0 %v169
      %v508 = vpop.f32.mrf.mxu0
      %v509 = vadd.f32 %v441, %v508
      %v510 = vpop.f32.mrf.mxu0
      %511 = vdwg.mxu0
      %512 = vmatprep.subr.mxu0 0.0
      %513 = vmatpush1.msra.mxu0 %v232
      %514 = vmatprep.subr.mxu0 0.0
      %515 = vmatpush1.msra.mxu0 %v231
      %516 = vmatprep.subr.mxu0 0.0
      %517 = vmatpush1.msra.mxu0 %v230
      %518 = vmatprep.subr.mxu0 0.0
      %519 = vmatpush1.msra.mxu0 %v229
      %520 = vmatprep.subr.mxu0 0.0
      %521 = vmatpush1.msra.mxu0 %v228
      %522 = vmatprep.subr.mxu0 0.0
      %523 = vmatpush1.msra.mxu0 %v227
      %524 = vmatprep.subr.mxu0 0.0
      %525 = vmatpush1.msra.mxu0 %v226
      %526 = vmatprep.subr.mxu0 0.0
      %527 = vmatpush1.msra.mxu0 %v225
      %528 = vmatprep.subr.mxu0 0.0
      %529 = vmatpush1.msra.mxu0 %v224
      %530 = vmatprep.subr.mxu0 0.0
      %531 = vmatpush1.msra.mxu0 %v223
      %532 = vmatprep.subr.mxu0 0.0
      %533 = vmatpush1.msra.mxu0 %v222
      %534 = vmatprep.subr.mxu0 0.0
      %535 = vmatpush1.msra.mxu0 %v221
      %536 = vmatprep.subr.mxu0 0.0
      %537 = vmatpush1.msra.mxu0 %v220
      %538 = vmatprep.subr.mxu0 0.0
      %539 = vmatpush1.msra.mxu0 %v219
      %540 = vmatprep.subr.mxu0 0.0
      %541 = vmatpush1.msra.mxu0 %v218
      %542 = vmatprep.subr.mxu0 0.0
      %543 = vmatpush1.msra.mxu0 %v217
      %544 = vmatprep.subr.mxu0 0.0
      %545 = vmatpush2.msra.mxu0 %v248
      %546 = vmatprep.subr.mxu0 0.0
      %547 = vmatpush2.msra.mxu0 %v247
      %548 = vmatprep.subr.mxu0 0.0
      %549 = vmatpush2.msra.mxu0 %v246
      %550 = vmatprep.subr.mxu0 0.0
      %551 = vmatpush2.msra.mxu0 %v245
      %552 = vmatprep.subr.mxu0 0.0
      %553 = vmatpush2.msra.mxu0 %v244
      %554 = vmatprep.subr.mxu0 0.0
      %555 = vmatpush2.msra.mxu0 %v243
      %556 = vmatprep.subr.mxu0 0.0
      %557 = vmatpush2.msra.mxu0 %v242
      %558 = vmatprep.subr.mxu0 0.0
      %559 = vmatpush2.msra.mxu0 %v241
      %560 = vmatprep.subr.mxu0 0.0
      %561 = vmatpush2.msra.mxu0 %v240
      %562 = vmatprep.subr.mxu0 0.0
      %563 = vmatpush2.msra.mxu0 %v239
      %564 = vmatprep.subr.mxu0 0.0
      %565 = vmatpush2.msra.mxu0 %v238
      %566 = vmatprep.subr.mxu0 0.0
      %567 = vmatpush2.msra.mxu0 %v237
      %568 = vmatprep.subr.mxu0 0.0
      %569 = vmatpush2.msra.mxu0 %v236
      %570 = vmatprep.subr.mxu0 0.0
      %571 = vmatpush2.msra.mxu0 %v235
      %572 = vmatprep.subr.mxu0 0.0
      %573 = vmatpush2.msra.mxu0 %v234
      %574 = vmatprep.subr.mxu0 0.0
      %575 = vmatpush2.msra.mxu0 %v233
      %576 = vmatprep.mubr.f32.mxu0 %v172
      %577 = vmatmul.mubr.f32.gmra.mxu0 %v171
      %v578 = vpop.f32.mrf.mxu0
      %v579 = vadd.f32 %v509, %v578
      %v580 = vpop.f32.mrf.mxu0
      %581 = vdwg.mxu0
      %582 = vmatprep.subr.mxu0 0.0
      %583 = vmatpush1.msra.mxu0 %v264
      %584 = vmatprep.subr.mxu0 0.0
      %585 = vmatpush1.msra.mxu0 %v263
      %586 = vmatprep.subr.mxu0 0.0
      %587 = vmatpush1.msra.mxu0 %v262
      %588 = vmatprep.subr.mxu0 0.0
      %589 = vmatpush1.msra.mxu0 %v261
      %590 = vmatprep.subr.mxu0 0.0
      %591 = vmatpush1.msra.mxu0 %v260
      %592 = vmatprep.subr.mxu0 0.0
      %593 = vmatpush1.msra.mxu0 %v259
      %594 = vmatprep.subr.mxu0 0.0
      %595 = vmatpush1.msra.mxu0 %v258
      %596 = vmatprep.subr.mxu0 0.0
      %597 = vmatpush1.msra.mxu0 %v257
      %598 = vmatprep.subr.mxu0 0.0
      %599 = vmatpush1.msra.mxu0 %v256
      %600 = vmatprep.subr.mxu0 0.0
      %601 = vmatpush1.msra.mxu0 %v255
      %602 = vmatprep.subr.mxu0 0.0
      %603 = vmatpush1.msra.mxu0 %v254
      %604 = vmatprep.subr.mxu0 0.0
      %605 = vmatpush1.msra.mxu0 %v253
      %606 = vmatprep.subr.mxu0 0.0
      %607 = vmatpush1.msra.mxu0 %v252
      %608 = vmatprep.subr.mxu0 0.0
      %609 = vmatpush1.msra.mxu0 %v251
      %610 = vmatprep.subr.mxu0 0.0
      %611 = vmatpush1.msra.mxu0 %v250
      %612 = vmatprep.subr.mxu0 0.0
      %613 = vmatpush1.msra.mxu0 %v249
      %614 = vmatprep.subr.mxu0 0.0
      %615 = vmatpush2.msra.mxu0 %v280
      %616 = vmatprep.subr.mxu0 0.0
      %617 = vmatpush2.msra.mxu0 %v279
      %618 = vmatprep.subr.mxu0 0.0
      %619 = vmatpush2.msra.mxu0 %v278
      %620 = vmatprep.subr.mxu0 0.0
      %621 = vmatpush2.msra.mxu0 %v277
      %622 = vmatprep.subr.mxu0 0.0
      %623 = vmatpush2.msra.mxu0 %v276
      %624 = vmatprep.subr.mxu0 0.0
      %625 = vmatpush2.msra.mxu0 %v275
      %626 = vmatprep.subr.mxu0 0.0
      %627 = vmatpush2.msra.mxu0 %v274
      %628 = vmatprep.subr.mxu0 0.0
      %629 = vmatpush2.msra.mxu0 %v273
      %630 = vmatprep.subr.mxu0 0.0
      %631 = vmatpush2.msra.mxu0 %v272
      %632 = vmatprep.subr.mxu0 0.0
      %633 = vmatpush2.msra.mxu0 %v271
      %634 = vmatprep.subr.mxu0 0.0
      %635 = vmatpush2.msra.mxu0 %v270
      %636 = vmatprep.subr.mxu0 0.0
      %637 = vmatpush2.msra.mxu0 %v269
      %638 = vmatprep.subr.mxu0 0.0
      %639 = vmatpush2.msra.mxu0 %v268
      %640 = vmatprep.subr.mxu0 0.0
      %641 = vmatpush2.msra.mxu0 %v267
      %642 = vmatprep.subr.mxu0 0.0
      %643 = vmatpush2.msra.mxu0 %v266
      %644 = vmatprep.subr.mxu0 0.0
      %645 = vmatpush2.msra.mxu0 %v265
      %646 = vmatprep.mubr.f32.mxu0 %v174
      %647 = vmatmul.mubr.f32.gmra.mxu0 %v173
      %v648 = vpop.f32.mrf.mxu0
      %v649 = vadd.f32 %v579, %v648
      %v650 = vpop.f32.mrf.mxu0
      %651 = vdwg.mxu0
      %652 = vmatprep.subr.mxu0 0.0
      %653 = vmatpush1.msra.mxu0 %v296
      %654 = vmatprep.subr.mxu0 0.0
      %655 = vmatpush1.msra.mxu0 %v295
      %656 = vmatprep.subr.mxu0 0.0
      %657 = vmatpush1.msra.mxu0 %v294
      %658 = vmatprep.subr.mxu0 0.0
      %659 = vmatpush1.msra.mxu0 %v293
      %660 = vmatprep.subr.mxu0 0.0
      %661 = vmatpush1.msra.mxu0 %v292
      %662 = vmatprep.subr.mxu0 0.0
      %663 = vmatpush1.msra.mxu0 %v291
      %664 = vmatprep.subr.mxu0 0.0
      %665 = vmatpush1.msra.mxu0 %v290
      %666 = vmatprep.subr.mxu0 0.0
      %667 = vmatpush1.msra.mxu0 %v289
      %668 = vmatprep.subr.mxu0 0.0
      %669 = vmatpush1.msra.mxu0 %v288
      %670 = vmatprep.subr.mxu0 0.0
      %671 = vmatpush1.msra.mxu0 %v287
      %672 = vmatprep.subr.mxu0 0.0
      %673 = vmatpush1.msra.mxu0 %v286
      %674 = vmatprep.subr.mxu0 0.0
      %675 = vmatpush1.msra.mxu0 %v285
      %676 = vmatprep.subr.mxu0 0.0
      %677 = vmatpush1.msra.mxu0 %v284
      %678 = vmatprep.subr.mxu0 0.0
      %679 = vmatpush1.msra.mxu0 %v283
      %680 = vmatprep.subr.mxu0 0.0
      %681 = vmatpush1.msra.mxu0 %v282
      %682 = vmatprep.subr.mxu0 0.0
      %683 = vmatpush1.msra.mxu0 %v281
      %684 = vmatprep.subr.mxu0 0.0
      %685 = vmatpush2.msra.mxu0 %v312
      %686 = vmatprep.subr.mxu0 0.0
      %687 = vmatpush2.msra.mxu0 %v311
      %688 = vmatprep.subr.mxu0 0.0
      %689 = vmatpush2.msra.mxu0 %v310
      %690 = vmatprep.subr.mxu0 0.0
      %691 = vmatpush2.msra.mxu0 %v309
      %692 = vmatprep.subr.mxu0 0.0
      %693 = vmatpush2.msra.mxu0 %v308
      %694 = vmatprep.subr.mxu0 0.0
      %695 = vmatpush2.msra.mxu0 %v307
      %696 = vmatprep.subr.mxu0 0.0
      %697 = vmatpush2.msra.mxu0 %v306
      %698 = vmatprep.subr.mxu0 0.0
      %699 = vmatpush2.msra.mxu0 %v305
      %700 = vmatprep.subr.mxu0 0.0
      %701 = vmatpush2.msra.mxu0 %v304
      %702 = vmatprep.subr.mxu0 0.0
      %703 = vmatpush2.msra.mxu0 %v303
      %704 = vmatprep.subr.mxu0 0.0
      %705 = vmatpush2.msra.mxu0 %v302
      %706 = vmatprep.subr.mxu0 0.0
      %707 = vmatpush2.msra.mxu0 %v301
      %708 = vmatprep.subr.mxu0 0.0
      %709 = vmatpush2.msra.mxu0 %v300
      %710 = vmatprep.subr.mxu0 0.0
      %711 = vmatpush2.msra.mxu0 %v299
      %712 = vmatprep.subr.mxu0 0.0
      %713 = vmatpush2.msra.mxu0 %v298
      %714 = vmatprep.subr.mxu0 0.0
      %715 = vmatpush2.msra.mxu0 %v297
      %716 = vmatprep.mubr.f32.mxu0 %v176
      %717 = vmatmul.mubr.f32.gmra.mxu0 %v175
      %v718 = vpop.f32.mrf.mxu0
      %v719 = vadd.f32 %v649, %v718
      %v720 = vpop.f32.mrf.mxu0
      %721 = vdwg.mxu0
      %722 = vmatprep.subr.mxu0 0.0
      %723 = vmatpush1.msra.mxu0 %v328
      %724 = vmatprep.subr.mxu0 0.0
      %725 = vmatpush1.msra.mxu0 %v327
      %726 = vmatprep.subr.mxu0 0.0
      %727 = vmatpush1.msra.mxu0 %v326
      %728 = vmatprep.subr.mxu0 0.0
      %729 = vmatpush1.msra.mxu0 %v325
      %730 = vmatprep.subr.mxu0 0.0
      %731 = vmatpush1.msra.mxu0 %v324
      %732 = vmatprep.subr.mxu0 0.0
      %733 = vmatpush1.msra.mxu0 %v323
      %734 = vmatprep.subr.mxu0 0.0
      %735 = vmatpush1.msra.mxu0 %v322
      %736 = vmatprep.subr.mxu0 0.0
      %737 = vmatpush1.msra.mxu0 %v321
      %738 = vmatprep.subr.mxu0 0.0
      %739 = vmatpush1.msra.mxu0 %v320
      %740 = vmatprep.subr.mxu0 0.0
      %741 = vmatpush1.msra.mxu0 %v319
      %742 = vmatprep.subr.mxu0 0.0
      %743 = vmatpush1.msra.mxu0 %v318
      %744 = vmatprep.subr.mxu0 0.0
      %745 = vmatpush1.msra.mxu0 %v317
      %746 = vmatprep.subr.mxu0 0.0
      %747 = vmatpush1.msra.mxu0 %v316
      %748 = vmatprep.subr.mxu0 0.0
      %749 = vmatpush1.msra.mxu0 %v315
      %750 = vmatprep.subr.mxu0 0.0
      %751 = vmatpush1.msra.mxu0 %v314
      %752 = vmatprep.subr.mxu0 0.0
      %753 = vmatpush1.msra.mxu0 %v313
      %754 = vmatprep.subr.mxu0 0.0
      %755 = vmatpush2.msra.mxu0 %v344
      %756 = vmatprep.subr.mxu0 0.0
      %757 = vmatpush2.msra.mxu0 %v343
      %758 = vmatprep.subr.mxu0 0.0
      %759 = vmatpush2.msra.mxu0 %v342
      %760 = vmatprep.subr.mxu0 0.0
      %761 = vmatpush2.msra.mxu0 %v341
      %762 = vmatprep.subr.mxu0 0.0
      %763 = vmatpush2.msra.mxu0 %v340
      %764 = vmatprep.subr.mxu0 0.0
      %765 = vmatpush2.msra.mxu0 %v339
      %766 = vmatprep.subr.mxu0 0.0
      %767 = vmatpush2.msra.mxu0 %v338
      %768 = vmatprep.subr.mxu0 0.0
      %769 = vmatpush2.msra.mxu0 %v337
      %770 = vmatprep.subr.mxu0 0.0
      %771 = vmatpush2.msra.mxu0 %v336
      %772 = vmatprep.subr.mxu0 0.0
      %773 = vmatpush2.msra.mxu0 %v335
      %774 = vmatprep.subr.mxu0 0.0
      %775 = vmatpush2.msra.mxu0 %v334
      %776 = vmatprep.subr.mxu0 0.0
      %777 = vmatpush2.msra.mxu0 %v333
      %778 = vmatprep.subr.mxu0 0.0
      %779 = vmatpush2.msra.mxu0 %v332
      %780 = vmatprep.subr.mxu0 0.0
      %781 = vmatpush2.msra.mxu0 %v331
      %782 = vmatprep.subr.mxu0 0.0
      %783 = vmatpush2.msra.mxu0 %v330
      %784 = vmatprep.subr.mxu0 0.0
      %785 = vmatpush2.msra.mxu0 %v329
      %786 = vmatprep.mubr.f32.mxu0 %v178
      %787 = vmatmul.mubr.f32.gmra.mxu0 %v177
      %v788 = vpop.f32.mrf.mxu0
      %v789 = vadd.f32 %v719, %v788
      %v790 = vpop.f32.mrf.mxu0
      %791 = vdwg.mxu0
      %792 = vmatprep.subr.mxu0 0.0
      %793 = vmatpush1.msra.mxu0 %v360
      %794 = vmatprep.subr.mxu0 0.0
      %795 = vmatpush1.msra.mxu0 %v359
      %796 = vmatprep.subr.mxu0 0.0
      %797 = vmatpush1.msra.mxu0 %v358
      %798 = vmatprep.subr.mxu0 0.0
      %799 = vmatpush1.msra.mxu0 %v357
      %800 = vmatprep.subr.mxu0 0.0
      %801 = vmatpush1.msra.mxu0 %v356
      %802 = vmatprep.subr.mxu0 0.0
      %803 = vmatpush1.msra.mxu0 %v355
      %804 = vmatprep.subr.mxu0 0.0
      %805 = vmatpush1.msra.mxu0 %v354
      %806 = vmatprep.subr.mxu0 0.0
      %807 = vmatpush1.msra.mxu0 %v353
      %808 = vmatprep.subr.mxu0 0.0
      %809 = vmatpush1.msra.mxu0 %v352
      %810 = vmatprep.subr.mxu0 0.0
      %811 = vmatpush1.msra.mxu0 %v351
      %812 = vmatprep.subr.mxu0 0.0
      %813 = vmatpush1.msra.mxu0 %v350
      %814 = vmatprep.subr.mxu0 0.0
      %815 = vmatpush1.msra.mxu0 %v349
      %816 = vmatprep.subr.mxu0 0.0
      %817 = vmatpush1.msra.mxu0 %v348
      %818 = vmatprep.subr.mxu0 0.0
      %819 = vmatpush1.msra.mxu0 %v347
      %820 = vmatprep.subr.mxu0 0.0
      %821 = vmatpush1.msra.mxu0 %v346
      %822 = vmatprep.subr.mxu0 0.0
      %823 = vmatpush1.msra.mxu0 %v345
      %824 = vmatprep.subr.mxu0 0.0
      %825 = vmatpush2.msra.mxu0 %v376
      %826 = vmatprep.subr.mxu0 0.0
      %827 = vmatpush2.msra.mxu0 %v375
      %828 = vmatprep.subr.mxu0 0.0
      %829 = vmatpush2.msra.mxu0 %v374
      %830 = vmatprep.subr.mxu0 0.0
      %831 = vmatpush2.msra.mxu0 %v373
      %832 = vmatprep.subr.mxu0 0.0
      %833 = vmatpush2.msra.mxu0 %v372
      %834 = vmatprep.subr.mxu0 0.0
      %835 = vmatpush2.msra.mxu0 %v371
      %836 = vmatprep.subr.mxu0 0.0
      %837 = vmatpush2.msra.mxu0 %v370
      %838 = vmatprep.subr.mxu0 0.0
      %839 = vmatpush2.msra.mxu0 %v369
      %840 = vmatprep.subr.mxu0 0.0
      %841 = vmatpush2.msra.mxu0 %v368
      %842 = vmatprep.subr.mxu0 0.0
      %843 = vmatpush2.msra.mxu0 %v367
      %844 = vmatprep.subr.mxu0 0.0
      %845 = vmatpush2.msra.mxu0 %v366
      %846 = vmatprep.subr.mxu0 0.0
      %847 = vmatpush2.msra.mxu0 %v365
      %848 = vmatprep.subr.mxu0 0.0
      %849 = vmatpush2.msra.mxu0 %v364
      %850 = vmatprep.subr.mxu0 0.0
      %851 = vmatpush2.msra.mxu0 %v363
      %852 = vmatprep.subr.mxu0 0.0
      %853 = vmatpush2.msra.mxu0 %v362
      %854 = vmatprep.subr.mxu0 0.0
      %855 = vmatpush2.msra.mxu0 %v361
      %856 = vmatprep.mubr.f32.mxu0 %v180
      %857 = vmatmul.mubr.f32.gmra.mxu0 %v179
      %v858 = vpop.f32.mrf.mxu0
      %v859 = vadd.f32 %v789, %v858
      %v860 = vpop.f32.mrf.mxu0
      %861 = vdwg.mxu0
      %862 = vmatprep.subr.mxu0 0.0
      %863 = vmatpush1.msra.mxu0 %v392
      %864 = vmatprep.subr.mxu0 0.0
      %865 = vmatpush1.msra.mxu0 %v391
      %866 = vmatprep.subr.mxu0 0.0
      %867 = vmatpush1.msra.mxu0 %v390
      %868 = vmatprep.subr.mxu0 0.0
      %869 = vmatpush1.msra.mxu0 %v389
      %870 = vmatprep.subr.mxu0 0.0
      %871 = vmatpush1.msra.mxu0 %v388
      %872 = vmatprep.subr.mxu0 0.0
      %873 = vmatpush1.msra.mxu0 %v387
      %874 = vmatprep.subr.mxu0 0.0
      %875 = vmatpush1.msra.mxu0 %v386
      %876 = vmatprep.subr.mxu0 0.0
      %877 = vmatpush1.msra.mxu0 %v385
      %878 = vmatprep.subr.mxu0 0.0
      %879 = vmatpush1.msra.mxu0 %v384
      %880 = vmatprep.subr.mxu0 0.0
      %881 = vmatpush1.msra.mxu0 %v383
      %882 = vmatprep.subr.mxu0 0.0
      %883 = vmatpush1.msra.mxu0 %v382
      %884 = vmatprep.subr.mxu0 0.0
      %885 = vmatpush1.msra.mxu0 %v381
      %886 = vmatprep.subr.mxu0 0.0
      %887 = vmatpush1.msra.mxu0 %v380
      %888 = vmatprep.subr.mxu0 0.0
      %889 = vmatpush1.msra.mxu0 %v379
      %890 = vmatprep.subr.mxu0 0.0
      %891 = vmatpush1.msra.mxu0 %v378
      %892 = vmatprep.subr.mxu0 0.0
      %893 = vmatpush1.msra.mxu0 %v377
      %894 = vmatprep.subr.mxu0 0.0
      %895 = vmatpush2.msra.mxu0 %v408
      %896 = vmatprep.subr.mxu0 0.0
      %897 = vmatpush2.msra.mxu0 %v407
      %898 = vmatprep.subr.mxu0 0.0
      %899 = vmatpush2.msra.mxu0 %v406
      %900 = vmatprep.subr.mxu0 0.0
      %901 = vmatpush2.msra.mxu0 %v405
      %902 = vmatprep.subr.mxu0 0.0
      %903 = vmatpush2.msra.mxu0 %v404
      %904 = vmatprep.subr.mxu0 0.0
      %905 = vmatpush2.msra.mxu0 %v403
      %906 = vmatprep.subr.mxu0 0.0
      %907 = vmatpush2.msra.mxu0 %v402
      %908 = vmatprep.subr.mxu0 0.0
      %909 = vmatpush2.msra.mxu0 %v401
      %910 = vmatprep.subr.mxu0 0.0
      %911 = vmatpush2.msra.mxu0 %v400
      %912 = vmatprep.subr.mxu0 0.0
      %913 = vmatpush2.msra.mxu0 %v399
      %914 = vmatprep.subr.mxu0 0.0
      %915 = vmatpush2.msra.mxu0 %v398
      %916 = vmatprep.subr.mxu0 0.0
      %917 = vmatpush2.msra.mxu0 %v397
      %918 = vmatprep.subr.mxu0 0.0
      %919 = vmatpush2.msra.mxu0 %v396
      %920 = vmatprep.subr.mxu0 0.0
      %921 = vmatpush2.msra.mxu0 %v395
      %922 = vmatprep.subr.mxu0 0.0
      %923 = vmatpush2.msra.mxu0 %v394
      %924 = vmatprep.subr.mxu0 0.0
      %925 = vmatpush2.msra.mxu0 %v393
      %926 = vmatprep.mubr.f32.mxu0 %v182
      %927 = vmatmul.mubr.f32.gmra.mxu0 %v181
      %v928 = vpop.f32.mrf.mxu0
      %v929 = vadd.f32 %v859, %v928
      %v930 = vpop.f32.mrf.mxu0
      %931 = vdwg.mxu0
      %932 = vmatprep.subr.mxu0 0.0
      %933 = vmatpush1.msra.mxu0 %v424
      %934 = vmatprep.subr.mxu0 0.0
      %935 = vmatpush1.msra.mxu0 %v423
      %936 = vmatprep.subr.mxu0 0.0
      %937 = vmatpush1.msra.mxu0 %v422
      %938 = vmatprep.subr.mxu0 0.0
      %939 = vmatpush1.msra.mxu0 %v421
      %940 = vmatprep.subr.mxu0 0.0
      %941 = vmatpush1.msra.mxu0 %v420
      %942 = vmatprep.subr.mxu0 0.0
      %943 = vmatpush1.msra.mxu0 %v419
      %944 = vmatprep.subr.mxu0 0.0
      %945 = vmatpush1.msra.mxu0 %v418
      %946 = vmatprep.subr.mxu0 0.0
      %947 = vmatpush1.msra.mxu0 %v417
      %948 = vmatprep.subr.mxu0 0.0
      %949 = vmatpush1.msra.mxu0 %v416
      %950 = vmatprep.subr.mxu0 0.0
      %951 = vmatpush1.msra.mxu0 %v415
      %952 = vmatprep.subr.mxu0 0.0
      %953 = vmatpush1.msra.mxu0 %v414
      %954 = vmatprep.subr.mxu0 0.0
      %955 = vmatpush1.msra.mxu0 %v413
      %956 = vmatprep.subr.mxu0 0.0
      %957 = vmatpush1.msra.mxu0 %v412
      %958 = vmatprep.subr.mxu0 0.0
      %959 = vmatpush1.msra.mxu0 %v411
      %960 = vmatprep.subr.mxu0 0.0
      %961 = vmatpush1.msra.mxu0 %v410
      %962 = vmatprep.subr.mxu0 0.0
      %963 = vmatpush1.msra.mxu0 %v409
      %964 = vmatprep.subr.mxu0 0.0
      %965 = vmatpush2.msra.mxu0 %v440
      %966 = vmatprep.subr.mxu0 0.0
      %967 = vmatpush2.msra.mxu0 %v439
      %968 = vmatprep.subr.mxu0 0.0
      %969 = vmatpush2.msra.mxu0 %v438
      %970 = vmatprep.subr.mxu0 0.0
      %971 = vmatpush2.msra.mxu0 %v437
      %972 = vmatprep.subr.mxu0 0.0
      %973 = vmatpush2.msra.mxu0 %v436
      %974 = vmatprep.subr.mxu0 0.0
      %975 = vmatpush2.msra.mxu0 %v435
      %976 = vmatprep.subr.mxu0 0.0
      %977 = vmatpush2.msra.mxu0 %v434
      %978 = vmatprep.subr.mxu0 0.0
      %979 = vmatpush2.msra.mxu0 %v433
      %980 = vmatprep.subr.mxu0 0.0
      %981 = vmatpush2.msra.mxu0 %v432
      %982 = vmatprep.subr.mxu0 0.0
      %983 = vmatpush2.msra.mxu0 %v431
      %984 = vmatprep.subr.mxu0 0.0
      %985 = vmatpush2.msra.mxu0 %v430
      %986 = vmatprep.subr.mxu0 0.0
      %987 = vmatpush2.msra.mxu0 %v429
      %988 = vmatprep.subr.mxu0 0.0
      %989 = vmatpush2.msra.mxu0 %v428
      %990 = vmatprep.subr.mxu0 0.0
      %991 = vmatpush2.msra.mxu0 %v427
      %992 = vmatprep.subr.mxu0 0.0
      %993 = vmatpush2.msra.mxu0 %v426
      %994 = vmatprep.subr.mxu0 0.0
      %995 = vmatpush2.msra.mxu0 %v425
      %996 = vmatprep.mubr.f32.mxu0 %v184
      %997 = vmatmul.mubr.f32.gmra.mxu0 %v183
      %v998 = vpop.f32.mrf.mxu0
      %v999 = vadd.f32 %v929, %v998
      %v1000 = vpop.f32.mrf.mxu0
      %1001 = vdwg.mxu0
      %1002 = vst [vmem:[%s168] sm:$0xff] %v999
      %p1003 = scmp.lt.s32.totalorder %s14, 1
      %s1004 = scalar_select %p1003, %s14, 1
      %s1005 = smul.addr %s1004, 8
      %s1006 = scalar_lea.vmem %s3, %s1005
      // Predicated region
      $region33: #{embeddings_forward.1} parent=31 // pred_check
        %p1007 = pneg %p100
      $region34: #{embeddings_forward.1} parent=31 // pred_check_branch
        %1009 = sbr.rel (%p1007) target = $region36
      $region35: #{embeddings_forward.1} parent=31 // pred_region
        _
      $region36: #{embeddings_forward.1} parent=31 // pred_fallthru
        _
    $region32: #{embeddings_forward.1} parent=5 // pred_fallthru
      _
    %p1010 = scmp.le.s32.totalorder 2, %s9
    // Predicated region
    $region37: #{embeddings_forward.1} parent=5 // pred_check
      %p1011 = pneg %p1010
    $region38: #{embeddings_forward.1} parent=5 // pred_check_branch
      %1013 = sbr.rel (%p1011) target = $region40
    $region39: #{embeddings_forward.1} parent=5 // pred_region
      %s1014 = ssub.s32 %s9, 2
      // Predicated region
      $region41: #{embeddings_forward.1} parent=39 // pred_check
        %p1015 = pneg %p106
      $region42: #{embeddings_forward.1} parent=39 // pred_check_branch
        %1017 = sbr.rel (%p1015) target = $region44
      $region43: #{embeddings_forward.1} parent=39 // pred_region
        %p1018 = scmp.lt.s32.totalorder %s15, 1
        %s1019 = scalar_select %p1018, %s15, 1
        %s1020 = smul.addr %s1019, 8
        %s1021 = scalar_lea.vmem %s3, %s1020
      $region44: #{embeddings_forward.1} parent=39 // pred_fallthru
        _
    $region40: #{embeddings_forward.1} parent=5 // pred_fallthru
      _
  $region6: #{embeddings_forward.1} parent=0 // loop_footer
    %s13 = sadd.s32 1, %s9
  $region7: #{embeddings_forward.1} parent=0 // loop_footer_branch
    %8 = sbr.rel target = $region3
  $region8: #{embeddings_forward.1} parent=0 // loop_exit
    _

</llo_original>
